<compile_context>
chip_gen: v5e
topology: v5e:2x2
jax: 0.10.0
libtpu: 0.0.40
codegen_flags: <defaults>
</compile_context>

<pallas_src>
import functools

import jax
import jax.numpy as jnp
from jax.experimental import pallas as pl
from jax.experimental.pallas import tpu as pltpu


def _round_up(x, m):
    return (x + m - 1) // m * m


def _tpu_generation():
    try:
        kind = jax.devices()[0].device_kind.lower()
    except Exception:
        return "unknown"
    if "v7" in kind:
        return "v7x"
    if "v6" in kind:
        return "v6e"
    if "v5" in kind:
        return "v5e"
    return "unknown"


# Generation-dependent tile / VMEM config (see perf review):
#   v5e: 128 MiB VMEM, ~240 FLOPs/B crossover -> tm=256, th=512
#   v6e: 128 MiB VMEM, ~655 FLOPs/B crossover -> tm=512, th=512, ~100 MiB limit
#   v7x:  64 MiB VMEM, ~310 FLOPs/B crossover -> tm=512, th=256, ~56 MiB limit
_TILE_CONFIG = {
    "v5e":     dict(tm=256, th=512, vmem_limit=100 * 1024 * 1024),
    "v6e":     dict(tm=512, th=512, vmem_limit=100 * 1024 * 1024),
    "v7x":     dict(tm=512, th=256, vmem_limit=56 * 1024 * 1024),
    "unknown": dict(tm=256, th=512, vmem_limit=64 * 1024 * 1024),
}


def default_config():
    return dict(_TILE_CONFIG[_tpu_generation()])


# ----------------------------------------------------------------------------
# Kernels
# ----------------------------------------------------------------------------
def _gated_chunk(x_ref, w13_ref, *, th, gate_dtype, w2_dtype):
    """First GEMM + SwiGLU gating for one hidden chunk; returns (tm, th)."""
    h13 = jnp.dot(x_ref[...], w13_ref[...], preferred_element_type=jnp.float32)
    h13 = h13.astype(gate_dtype)          # bf16 gating on v6e/v7x, f32 otherwise
    h1 = h13[:, :th]                       # w1(x) chunk (lane-aligned, th % 128 == 0)
    h3 = h13[:, th:]                       # w3(x) chunk
    gated = (h1 * jax.nn.sigmoid(h1)) * h3
    return gated.astype(w2_dtype)


def ffn_kernel_scratch(x_ref, w13_ref, w2_ref, o_ref, acc_ref, *, th, gate_dtype):
    """Accumulate in a VMEM f32 scratch (used when output dtype != f32).

    x_ref:   (tm, Dp)     token tile (resident across hidden axis)
    w13_ref: (Dp, 2*th)   fused [w1 | w3] hidden chunk
    w2_ref:  (th, Op)     w2 hidden chunk
    o_ref:   (tm, Op)     output tile, written on the last hidden step
    acc_ref: (tm, Op) f32 accumulator
    """
    h = pl.program_id(1)

    @pl.when(h == 0)
    def _():
        acc_ref[...] = jnp.zeros_like(acc_ref)

    gated = _gated_chunk(x_ref, w13_ref, th=th, gate_dtype=gate_dtype,
                         w2_dtype=w2_ref.dtype)
    acc_ref[...] += jnp.dot(gated, w2_ref[...], preferred_element_type=jnp.float32)

    @pl.when(h == pl.num_programs(1) - 1)
    def _():
        o_ref[...] = acc_ref[...].astype(o_ref.dtype)


def ffn_kernel_accout(x_ref, w13_ref, w2_ref, o_ref, *, th, gate_dtype):
    """f32 output: accumulate directly into o_ref (resident across hidden axis);
    no scratch accumulator and no final copy."""
    h = pl.program_id(1)

    @pl.when(h == 0)
    def _():
        o_ref[...] = jnp.zeros_like(o_ref)

    gated = _gated_chunk(x_ref, w13_ref, th=th, gate_dtype=gate_dtype,
                         w2_dtype=w2_ref.dtype)
    o_ref[...] += jnp.dot(gated, w2_ref[...], preferred_element_type=jnp.float32)


# ----------------------------------------------------------------------------
# One-time weight packing (call at module init, NOT per forward)
# ----------------------------------------------------------------------------
def prepare_weights(w1, w2, w3, *, th=None, compute_dtype=None):
    """Pack PyTorch-layout (out, in) weights for the kernel.

    - transpose to (in, out) once,
    - zero-pad every feature dim to a multiple of 128 (lane-dense),
    - interleave w1^T / w3^T in hidden chunks of width `th` so hidden step h
      reads one contiguous (Dp, 2*th) window.

    compute_dtype defaults to bfloat16 on every generation (halves the dominant
    weight HBM stream; v5e MXU runs bf16 at full rate).  Pass jnp.float32 for an
    exact f32 path.
    """
    cfg = default_config()
    if th is None:
        th = cfg["th"]
    dt = jnp.dtype(compute_dtype) if compute_dtype is not None else jnp.dtype(jnp.bfloat16)

    H, D = w1.shape
    O = w2.shape[0]

    th = _round_up(min(th, _round_up(H, 128)), 128)
    Dp = _round_up(D, 128)
    Hp = _round_up(H, th)            # th divides Hp by construction
    Op = _round_up(O, 128)

    w1t = jnp.zeros((Dp, Hp), dt).at[:D, :H].set(w1.T.astype(dt))
    w3t = jnp.zeros((Dp, Hp), dt).at[:D, :H].set(w3.T.astype(dt))
    w2t = jnp.zeros((Hp, Op), dt).at[:H, :O].set(w2.T.astype(dt))

    nh = Hp // th
    w13t = jnp.concatenate(
        [w1t.reshape(Dp, nh, th), w3t.reshape(Dp, nh, th)], axis=-1
    ).reshape(Dp, nh * 2 * th)       # hidden block h = columns [2*th*h, 2*th*(h+1))

    dims = dict(D=D, H=H, O=O, Dp=Dp, Hp=Hp, Op=Op, th=th)
    return w13t, w2t, dims


# ----------------------------------------------------------------------------
# Forward
# ----------------------------------------------------------------------------
def feed_forward(x, w13t, w2t, dims, *, tm=None, vmem_limit_bytes=None):
    """x: (batch, seq, in_dim) -> (batch, seq, out_dim).

    Dropout layers d2/d3 are eval-mode identities.
    """
    cfg = default_config()
    gen = _tpu_generation()
    if tm is None:
        tm = cfg["tm"]
    if vmem_limit_bytes is None:
        vmem_limit_bytes = cfg["vmem_limit"]

    B, S, _ = x.shape
    D, H, O = dims["D"], dims["H"], dims["O"]
    Dp, Hp, Op, th = dims["Dp"], dims["Hp"], dims["Op"], dims["th"]
    M = B * S

    tm = max(8, min(tm, _round_up(M, 8)))    # don't over-tile tiny inputs
    Mp = _round_up(M, tm)

    compute_dtype = w13t.dtype
    # bf16 gating only where the VPU/EUP have bf16 lanes (v6e/v7x); f32 elsewhere.
    if compute_dtype == jnp.bfloat16 and gen in ("v6e", "v7x"):
        gate_dtype = jnp.bfloat16
    else:
        gate_dtype = jnp.float32

    x2d = jnp.zeros((Mp, Dp), compute_dtype).at[:M, :D].set(
        x.reshape(M, D).astype(compute_dtype))

    num_token_tiles = Mp // tm
    num_hidden_steps = Hp // th
    grid = (num_token_tiles, num_hidden_steps)

    out_dtype = jnp.dtype(x.dtype)
    acc_in_out = (out_dtype == jnp.dtype(jnp.float32))

    # Decode / small-M regime: keep the large weight DMAs back-to-back.
    use_deep_buffering = (num_token_tiles == 1 and num_hidden_steps >= 3)

    def weight_spec(shape, index_map):
        if use_deep_buffering:
            return pl.BlockSpec(shape, index_map, pipeline_mode=pl.Buffered(3))
        return pl.BlockSpec(shape, index_map)

    # Weights are re-read once per token tile -> multiply by num_token_tiles.
    cost = pl.CostEstimate(
        flops=int(2 * M * D * 2 * H + 2 * M * H * O),
        transcendentals=int(M * H),
        bytes_accessed=int(x2d.nbytes
                           + (w13t.nbytes + w2t.nbytes) * num_token_tiles
                           + Mp * Op * out_dtype.itemsize),
    )

    if acc_in_out:
        kernel_fn = functools.partial(ffn_kernel_accout, th=th, gate_dtype=gate_dtype)
        scratch_shapes = []
    else:
        kernel_fn = functools.partial(ffn_kernel_scratch, th=th, gate_dtype=gate_dtype)
        scratch_shapes = [pltpu.VMEM((tm, Op), jnp.float32)]

    out2d = pl.pallas_call(
        kernel_fn,
        out_shape=jax.ShapeDtypeStruct((Mp, Op), out_dtype),
        grid_spec=pltpu.PrefetchScalarGridSpec(
            num_scalar_prefetch=0,
            grid=grid,
            in_specs=[
                pl.BlockSpec((tm, Dp), lambda i, h: (i, 0)),        # x tile
                weight_spec((Dp, 2 * th), lambda i, h: (0, h)),     # [w1|w3] chunk
                weight_spec((th, Op), lambda i, h: (h, 0)),         # w2 chunk
            ],
            out_specs=pl.BlockSpec((tm, Op), lambda i, h: (i, 0)),
            scratch_shapes=scratch_shapes,
        ),
        compiler_params=pltpu.CompilerParams(
            dimension_semantics=("parallel", "arbitrary"),
            vmem_limit_bytes=int(vmem_limit_bytes),
        ),
        cost_estimate=cost,
    )(x2d, w13t, w2t)

    return out2d[:M, :O].reshape(B, S, O)


def feed_forward_ref(x, w1, w2, w3):
    """Pure-JAX reference (eval-mode dropout = identity)."""
    h1 = x @ w1.T
    h3 = x @ w3.T
    g = (h1 * jax.nn.sigmoid(h1)) * h3
    return g @ w2.T


if __name__ == "__main__":
    # Small shapes consistent with the module: in_dim=32, hidden_dim=64, out_dim=32
    batch, seq = 2, 8
    in_dim, hidden_dim, out_dim = 32, 64, 32

    key = jax.random.PRNGKey(0)
    kx, k1, k2, k3 = jax.random.split(key, 4)

    x = jax.random.normal(kx, (batch, seq, in_dim), dtype=jnp.float32)
    # PyTorch nn.Linear weight layout: (out, in)
    w1 = jax.random.normal(k1, (hidden_dim, in_dim), dtype=jnp.float32) * 0.05
    w2 = jax.random.normal(k2, (out_dim, hidden_dim), dtype=jnp.float32) * 0.05
    w3 = jax.random.normal(k3, (hidden_dim, in_dim), dtype=jnp.float32) * 0.05

    # Pack weights once.  Production call sites should use the default
    # compute_dtype (bfloat16, every generation); f32 here for an exact check.
    w13t, w2t, dims = prepare_weights(w1, w2, w3, compute_dtype=jnp.float32)

    out = feed_forward(x, w13t, w2t, dims)
    out = jax.block_until_ready(out)

    ref = feed_forward_ref(x, w1, w2, w3)
    assert out.shape == (batch, seq, out_dim)
    assert jnp.allclose(out, ref, atol=2e-5, rtol=2e-5), "mismatch vs reference"

    print("KERNEL_OK")
</pallas_src>

<mosaic_0001>
module attributes {stable_mosaic.version = 11 : i64} {
  func.func @ffn_kernel_accout(%arg0: i32, %arg1: i32, %arg2: memref<16x128xf32, #tpu.memory_space<vmem>>, %arg3: memref<128x256xf32, #tpu.memory_space<vmem>>, %arg4: memref<128x128xf32, #tpu.memory_space<vmem>>, %arg5: memref<16x128xf32, #tpu.memory_space<vmem>>) attributes {dimension_semantics = [#tpu.dimension_semantics<parallel>, #tpu.dimension_semantics<arbitrary>], iteration_bounds = array<i64: 1, 1>, scalar_prefetch = 0 : i64, scratch_operands = 0 : i64, tpu.core_type = #tpu.core_type<tc>, window_params = [{transform_indices = @transform_0, window_bounds = array<i64: 16, 128>}, {transform_indices = @transform_1, window_bounds = array<i64: 128, 256>}, {transform_indices = @transform_2, window_bounds = array<i64: 128, 128>}, {transform_indices = @transform_3, window_bounds = array<i64: 16, 128>}]} {
    %c0_i32 = arith.constant 0 : i32
    %0 = arith.cmpi eq, %arg1, %c0_i32 : i32
    %1 = arith.extui %0 : i1 to i32
    %c0_i32_0 = arith.constant 0 : i32
    %2 = arith.cmpi ne, %1, %c0_i32_0 : i32
    scf.if %2 {
      %cst_12 = arith.constant 0.000000e+00 : f32
      %20 = vector.broadcast %cst_12 : f32 to vector<16x128xf32>
      %c0_13 = arith.constant 0 : index
      %c0_14 = arith.constant 0 : index
      %21 = vector.load %arg5[%c0_13, %c0_14] : memref<16x128xf32, #tpu.memory_space<vmem>>, vector<16x128xf32>
      tpu.vector_store %arg5[%c0_13, %c0_14], %20 {strides = array<i32>} : memref<16x128xf32, #tpu.memory_space<vmem>>, vector<16x128xf32>,
    } else {
    }
    %c0 = arith.constant 0 : index
    %c0_1 = arith.constant 0 : index
    %3 = vector.load %arg2[%c0, %c0_1] : memref<16x128xf32, #tpu.memory_space<vmem>>, vector<16x128xf32>
    %c0_2 = arith.constant 0 : index
    %c0_3 = arith.constant 0 : index
    %4 = vector.load %arg3[%c0_2, %c0_3] : memref<128x256xf32, #tpu.memory_space<vmem>>, vector<128x256xf32>
    %cst = arith.constant dense<0.000000e+00> : vector<16x256xf32>
    %5 = tpu.matmul %3, %4, %cst {dimension_numbers = #tpu.dot_dimension_numbers<[1], [0], [0], [1], [0, 0, 1, 1], [], []>} : vector<16x128xf32>, vector<128x256xf32>, vector<16x256xf32> -> vector<16x256xf32>
    %6 = vector.extract_strided_slice %5 {offsets = [0, 0], sizes = [16, 128], strides = [1, 1]} : vector<16x256xf32> to vector<16x128xf32>
    %7 = vector.extract_strided_slice %5 {offsets = [0, 128], sizes = [16, 128], strides = [1, 1]} : vector<16x256xf32> to vector<16x128xf32>
    %8 = arith.negf %6 : vector<16x128xf32>
    %9 = math.exp %8 : vector<16x128xf32>
    %cst_4 = arith.constant 1.000000e+00 : f32
    %10 = vector.broadcast %cst_4 : f32 to vector<16x128xf32>
    %11 = arith.addf %10, %9 : vector<16x128xf32>
    %12 = arith.divf %10, %11 : vector<16x128xf32>
    %13 = arith.mulf %6, %12 : vector<16x128xf32>
    %14 = arith.mulf %13, %7 : vector<16x128xf32>
    %c0_5 = arith.constant 0 : index
    %c0_6 = arith.constant 0 : index
    %15 = vector.load %arg5[%c0_5, %c0_6] : memref<16x128xf32, #tpu.memory_space<vmem>>, vector<16x128xf32>
    %c0_7 = arith.constant 0 : index
    %c0_8 = arith.constant 0 : index
    %16 = vector.load %arg4[%c0_7, %c0_8] : memref<128x128xf32, #tpu.memory_space<vmem>>, vector<128x128xf32>
    %cst_9 = arith.constant dense<0.000000e+00> : vector<16x128xf32>
    %17 = tpu.matmul %14, %16, %cst_9 {dimension_numbers = #tpu.dot_dimension_numbers<[1], [0], [0], [1], [0, 0, 1, 1], [], []>} : vector<16x128xf32>, vector<128x128xf32>, vector<16x128xf32> -> vector<16x128xf32>
    %18 = arith.addf %15, %17 : vector<16x128xf32>
    %c0_10 = arith.constant 0 : index
    %c0_11 = arith.constant 0 : index
    %19 = vector.load %arg5[%c0_10, %c0_11] : memref<16x128xf32, #tpu.memory_space<vmem>>, vector<16x128xf32>
    tpu.vector_store %arg5[%c0_10, %c0_11], %18 {strides = array<i32>} : memref<16x128xf32, #tpu.memory_space<vmem>>, vector<16x128xf32>,
    return
  }
  func.func @transform_0(%arg0: i32, %arg1: i32) -> (i32, i32) {
    %c0_i32 = arith.constant 0 : i32
    %c0_i32_0 = arith.constant 0 : i32
    return %arg0, %c0_i32 : i32, i32
  }
  func.func @transform_1(%arg0: i32, %arg1: i32) -> (i32, i32) {
    %c0_i32 = arith.constant 0 : i32
    %c0_i32_0 = arith.constant 0 : i32
    return %c0_i32, %arg1 : i32, i32
  }
  func.func @transform_2(%arg0: i32, %arg1: i32) -> (i32, i32) {
    %c0_i32 = arith.constant 0 : i32
    %c0_i32_0 = arith.constant 0 : i32
    return %arg1, %c0_i32 : i32, i32
  }
  func.func @transform_3(%arg0: i32, %arg1: i32) -> (i32, i32) {
    %c0_i32 = arith.constant 0 : i32
    %c0_i32_0 = arith.constant 0 : i32
    return %arg0, %c0_i32 : i32, i32
  }
}

</mosaic_0001>

<llo_original>
// kernel: tpu_custom_call.1
$region0: #{tpu_custom_call.1}
  #allocation0 [shape = 'u32[]', space=smem, size = 0x4, offset = 0x4, fixed_abs, tag = 'smem constant byte address 0x4 - core index']
  #allocation1 [shape = 'u32[72,128]{1,0:T(1,128)}', space=vmem, size = 0x9000, scoped, tag = 'internal scratch']
  %s0 = inlined_call_operand.hbm [shape: f32[16,128], index: 0, kind: input, shape index: {}]
  %s1 = inlined_call_operand.hbm [shape: f32[128,256], index: 1, kind: input, shape index: {}]
  %s2 = inlined_call_operand.hbm [shape: f32[128,128], index: 2, kind: input, shape index: {}]
  %s3 = inlined_call_operand.hbm [shape: f32[16,128], index: 3, kind: output, shape index: {}]
  %s4 = sld [smem:[#allocation0]]
  $region38: #{tpu_custom_call.1} parent=0
    _
  %s6 = ssub.s32 1, %s4
  %s7 = scalar_select 0, %s6, %s4
  $region1: #{tpu_custom_call.1} parent=0
    #allocation2 [shape = 'u8[8192]{0}', space=vmem, size = 0x2000, scoped, tag = 'input window, operand 0, single buffered']
    #allocation3 [shape = 's32[1]{0}', space=sflag, size = 0x4, scoped, tag = 'scoped memory for tpu_custom_call.1']
    #allocation4 [shape = 's32[1]{0}', space=sflag, size = 0x4, scoped, tag = 'scoped memory for tpu_custom_call.1']
    #allocation5 [shape = 'u8[131072]{0}', space=vmem, size = 0x20000, scoped, tag = 'input window, operand 1, single buffered']
    #allocation6 [shape = 's32[1]{0}', space=sflag, size = 0x4, scoped, tag = 'scoped memory for tpu_custom_call.1']
    #allocation7 [shape = 'u8[65536]{0}', space=vmem, size = 0x10000, scoped, tag = 'input window, operand 2, single buffered']
    #allocation8 [shape = 'u8[8192]{0}', space=vmem, size = 0x2000, scoped, tag = 'output window, operand 0, single buffered']
    %8 = vsyncpa [#allocation3], 0
    %9 = vsyncpa [#allocation6], 0
    %10 = vsyncpa [#allocation4], 0
    // Predicated region
    $region2: #{tpu_custom_call.1} parent=1 // pred_check
      _
    $region3: #{tpu_custom_call.1} parent=1 // pred_check_branch
      %12 = sbr.rel (0) target = $region5
    $region4: #{tpu_custom_call.1} parent=1 // pred_region
      %14 = vsyncadd [#allocation3], 0
      %s15 = sshll.u32 %s0, 4
      %s16 = int_to_ptr.hbm [resolvable:$true] %s15
      %s17 = sshll.u32 [#allocation2], 4
      %s18 = int_to_ptr.vmem [resolvable:$true] %s17
      %23 = dma.hbm_to_vmem [thread:$0]  %s16, 256, %s18, [#allocation3], 128, 128, 8
    $region5: #{tpu_custom_call.1} parent=1 // pred_fallthru
      _
    // Predicated region
    $region6: #{tpu_custom_call.1} parent=1 // pred_check
      _
    $region7: #{tpu_custom_call.1} parent=1 // pred_check_branch
      %25 = sbr.rel (0) target = $region9
    $region8: #{tpu_custom_call.1} parent=1 // pred_region
      %27 = vsyncadd [#allocation6], 0
      %s28 = sshll.u32 %s1, 4
      %s29 = int_to_ptr.hbm [resolvable:$true] %s28
      %s30 = sshll.u32 [#allocation5], 4
      %s31 = int_to_ptr.vmem [resolvable:$true] %s30
      %36 = dma.hbm_to_vmem [thread:$0]  %s29, 4096, %s31, [#allocation6], 256, 256, 16
    $region9: #{tpu_custom_call.1} parent=1 // pred_fallthru
      _
    // Predicated region
    $region10: #{tpu_custom_call.1} parent=1 // pred_check
      _
    $region11: #{tpu_custom_call.1} parent=1 // pred_check_branch
      %38 = sbr.rel (0) target = $region13
    $region12: #{tpu_custom_call.1} parent=1 // pred_region
      %40 = vsyncadd [#allocation6], 0
      %s41 = sshll.u32 %s2, 4
      %s42 = int_to_ptr.hbm [resolvable:$true] %s41
      %s43 = sshll.u32 [#allocation7], 4
      %s44 = int_to_ptr.vmem [resolvable:$true] %s43
      %49 = dma.hbm_to_vmem [thread:$0]  %s42, 2048, %s44, [#allocation6], 128, 128, 8
    $region13: #{tpu_custom_call.1} parent=1 // pred_fallthru
      _
    // Predicated region
    $region14: #{tpu_custom_call.1} parent=1 // pred_check
      _
    $region15: #{tpu_custom_call.1} parent=1 // pred_check_branch
      %51 = sbr.rel (0) target = $region17
    $region16: #{tpu_custom_call.1} parent=1 // pred_region
      %53 = dma.done [#allocation3], 256
    $region17: #{tpu_custom_call.1} parent=1 // pred_fallthru
      _
    // Predicated region
    $region18: #{tpu_custom_call.1} parent=1 // pred_check
      _
    $region19: #{tpu_custom_call.1} parent=1 // pred_check_branch
      %55 = sbr.rel (0) target = $region21
    $region20: #{tpu_custom_call.1} parent=1 // pred_region
      %57 = dma.done [#allocation6], 4096
    $region21: #{tpu_custom_call.1} parent=1 // pred_fallthru
      _
    // Predicated region
    $region22: #{tpu_custom_call.1} parent=1 // pred_check
      _
    $region23: #{tpu_custom_call.1} parent=1 // pred_check_branch
      %59 = sbr.rel (0) target = $region25
    $region24: #{tpu_custom_call.1} parent=1 // pred_region
      %61 = dma.done [#allocation6], 2048
    $region25: #{tpu_custom_call.1} parent=1 // pred_fallthru
      _
    %p62 = scmp.eq.s32.totalorder 0, 0
    // Predicated region
    $region26: #{tpu_custom_call.1} parent=1 // pred_check
      %p63 = pneg %p62
    $region27: #{tpu_custom_call.1} parent=1 // pred_check_branch
      %65 = sbr.rel (%p63) target = $region29
    $region28: #{tpu_custom_call.1} parent=1 // pred_region
      %66 = vst [vmem:[#allocation8] sm:$0xff] 0.0
      %67 = vst [vmem:[#allocation8 + $0x8] sm:$0xff] 0.0
    $region29: #{tpu_custom_call.1} parent=1 // pred_fallthru
      _
    %v68 = vld [vmem:[#allocation2] sm:$0xff]
    %v69 = vld [vmem:[#allocation2 + $0x8] sm:$0xff]
    %v70 = vld [vmem:[#allocation5] sm:$0xff]
    %v71 = vld [vmem:[#allocation5 + $0x8] sm:$0xff]
    %v72 = vld [vmem:[#allocation5 + $0x10] sm:$0xff]
    %v73 = vld [vmem:[#allocation5 + $0x18] sm:$0xff]
    %v74 = vld [vmem:[#allocation5 + $0x20] sm:$0xff]
    %v75 = vld [vmem:[#allocation5 + $0x28] sm:$0xff]
    %v76 = vld [vmem:[#allocation5 + $0x30] sm:$0xff]
    %v77 = vld [vmem:[#allocation5 + $0x38] sm:$0xff]
    %v78 = vld [vmem:[#allocation5 + $0x40] sm:$0xff]
    %v79 = vld [vmem:[#allocation5 + $0x48] sm:$0xff]
    %v80 = vld [vmem:[#allocation5 + $0x50] sm:$0xff]
    %v81 = vld [vmem:[#allocation5 + $0x58] sm:$0xff]
    %v82 = vld [vmem:[#allocation5 + $0x60] sm:$0xff]
    %v83 = vld [vmem:[#allocation5 + $0x68] sm:$0xff]
    %v84 = vld [vmem:[#allocation5 + $0x70] sm:$0xff]
    %v85 = vld [vmem:[#allocation5 + $0x78] sm:$0xff]
    %v86 = vld [vmem:[#allocation5 + $0x80] sm:$0xff]
    %v87 = vld [vmem:[#allocation5 + $0x88] sm:$0xff]
    %v88 = vld [vmem:[#allocation5 + $0x90] sm:$0xff]
    %v89 = vld [vmem:[#allocation5 + $0x98] sm:$0xff]
    %v90 = vld [vmem:[#allocation5 + $0xa0] sm:$0xff]
    %v91 = vld [vmem:[#allocation5 + $0xa8] sm:$0xff]
    %v92 = vld [vmem:[#allocation5 + $0xb0] sm:$0xff]
    %v93 = vld [vmem:[#allocation5 + $0xb8] sm:$0xff]
    %v94 = vld [vmem:[#allocation5 + $0xc0] sm:$0xff]
    %v95 = vld [vmem:[#allocation5 + $0xc8] sm:$0xff]
    %v96 = vld [vmem:[#allocation5 + $0xd0] sm:$0xff]
    %v97 = vld [vmem:[#allocation5 + $0xd8] sm:$0xff]
    %v98 = vld [vmem:[#allocation5 + $0xe0] sm:$0xff]
    %v99 = vld [vmem:[#allocation5 + $0xe8] sm:$0xff]
    %v100 = vld [vmem:[#allocation5 + $0xf0] sm:$0xff]
    %v101 = vld [vmem:[#allocation5 + $0xf8] sm:$0xff]
    %102 = vmatpush.msra.mxu0 %v100
    %103 = vmatpush.msra.mxu0 %v98
    %104 = vmatpush.msra.mxu0 %v96
    %105 = vmatpush.msra.mxu0 %v94
    %106 = vmatpush.msra.mxu0 %v92
    %107 = vmatpush.msra.mxu0 %v90
    %108 = vmatpush.msra.mxu0 %v88
    %109 = vmatpush.msra.mxu0 %v86
    %110 = vmatpush.msra.mxu0 %v84
    %111 = vmatpush.msra.mxu0 %v82
    %112 = vmatpush.msra.mxu0 %v80
    %113 = vmatpush.msra.mxu0 %v78
    %114 = vmatpush.msra.mxu0 %v76
    %115 = vmatpush.msra.mxu0 %v74
    %116 = vmatpush.msra.mxu0 %v72
    %117 = vmatpush.msra.mxu0 %v70
    %118 = vmatmul.f32.gmra.mxu0 %v68
    %v119 = vpop.f32.mrf.mxu0
    %v120 = vadd.f32 0.0, %v119
    %121 = vmatmul.f32.gmra.mxu0 %v69
    %v122 = vpop.f32.mrf.mxu0
    %v123 = vadd.f32 0.0, %v122
    %124 = vdwg.mxu0
    %125 = vmatpush.msra.mxu0 %v101
    %126 = vmatpush.msra.mxu0 %v99
    %127 = vmatpush.msra.mxu0 %v97
    %128 = vmatpush.msra.mxu0 %v95
    %129 = vmatpush.msra.mxu0 %v93
    %130 = vmatpush.msra.mxu0 %v91
    %131 = vmatpush.msra.mxu0 %v89
    %132 = vmatpush.msra.mxu0 %v87
    %133 = vmatpush.msra.mxu0 %v85
    %134 = vmatpush.msra.mxu0 %v83
    %135 = vmatpush.msra.mxu0 %v81
    %136 = vmatpush.msra.mxu0 %v79
    %137 = vmatpush.msra.mxu0 %v77
    %138 = vmatpush.msra.mxu0 %v75
    %139 = vmatpush.msra.mxu0 %v73
    %140 = vmatpush.msra.mxu0 %v71
    %141 = vmatmul.f32.gmra.mxu0 %v68
    %v142 = vpop.f32.mrf.mxu0
    %v143 = vadd.f32 0.0, %v142
    %144 = vmatmul.f32.gmra.mxu0 %v69
    %v145 = vpop.f32.mrf.mxu0
    %v146 = vadd.f32 0.0, %v145
    %147 = vdwg.mxu0
    %v148 = vxor.u32 %v120, 2147483648
    %v149 = vxor.u32 %v123, 2147483648
    %v150 = vmul.f32 %v148, 1.442695
    %v151 = vpow.pop %v150
    %v152 = vmul.f32 %v149, 1.442695
    %v153 = vpow.pop %v152
    %v154 = vadd.f32 %v151, 1.0
    %v155 = vadd.f32 %v153, 1.0
    %v156 = vrcp.pop %v154
    %v157 = vmul.f32 %v154, %v156
    %v158 = vsub.f32 1.0, %v157
    %v159 = vmul.f32 %v156, %v158
    %v160 = vadd.f32 %v156, %v159
    %vm161 = vweird.f32 %v154
    %vm162 = vweird.f32 %v156
    %vm163 = vmor %vm161, %vm162
    %v164 = vsel %vm163, %v156, %v160
    %v165 = vand.u32 2147483647, %v154
    %vm166 = vcmp.eq.f32.partialorder %v165, 8.507059e+37
    %v167 = vand.u32 %v154, 2147483648
    %v168 = vor.u32 1.1754944e-38, %v167
    %v169 = vsel %vm166, %v168, %v164
    %v170 = vmul.f32 1.0, %v169
    %v171 = vrcp.pop %v155
    %v172 = vmul.f32 %v155, %v171
    %v173 = vsub.f32 1.0, %v172
    %v174 = vmul.f32 %v171, %v173
    %v175 = vadd.f32 %v171, %v174
    %vm176 = vweird.f32 %v155
    %vm177 = vweird.f32 %v171
    %vm178 = vmor %vm176, %vm177
    %v179 = vsel %vm178, %v171, %v175
    %v180 = vand.u32 2147483647, %v155
    %vm181 = vcmp.eq.f32.partialorder %v180, 8.507059e+37
    %v182 = vand.u32 %v155, 2147483648
    %v183 = vor.u32 1.1754944e-38, %v182
    %v184 = vsel %vm181, %v183, %v179
    %v185 = vmul.f32 1.0, %v184
    %v186 = vmul.f32 %v120, %v170
    %v187 = vmul.f32 %v123, %v185
    %v188 = vmul.f32 %v186, %v143
    %v189 = vmul.f32 %v187, %v146
    %v190 = vld [vmem:[#allocation8] sm:$0xff]
    %v191 = vld [vmem:[#allocation8 + $0x8] sm:$0xff]
    %v192 = vld [vmem:[#allocation7] sm:$0xff]
    %v193 = vld [vmem:[#allocation7 + $0x8] sm:$0xff]
    %v194 = vld [vmem:[#allocation7 + $0x10] sm:$0xff]
    %v195 = vld [vmem:[#allocation7 + $0x18] sm:$0xff]
    %v196 = vld [vmem:[#allocation7 + $0x20] sm:$0xff]
    %v197 = vld [vmem:[#allocation7 + $0x28] sm:$0xff]
    %v198 = vld [vmem:[#allocation7 + $0x30] sm:$0xff]
    %v199 = vld [vmem:[#allocation7 + $0x38] sm:$0xff]
    %v200 = vld [vmem:[#allocation7 + $0x40] sm:$0xff]
    %v201 = vld [vmem:[#allocation7 + $0x48] sm:$0xff]
    %v202 = vld [vmem:[#allocation7 + $0x50] sm:$0xff]
    %v203 = vld [vmem:[#allocation7 + $0x58] sm:$0xff]
    %v204 = vld [vmem:[#allocation7 + $0x60] sm:$0xff]
    %v205 = vld [vmem:[#allocation7 + $0x68] sm:$0xff]
    %v206 = vld [vmem:[#allocation7 + $0x70] sm:$0xff]
    %v207 = vld [vmem:[#allocation7 + $0x78] sm:$0xff]
    %208 = vmatpush.msra.mxu0 %v207
    %209 = vmatpush.msra.mxu0 %v206
    %210 = vmatpush.msra.mxu0 %v205
    %211 = vmatpush.msra.mxu0 %v204
    %212 = vmatpush.msra.mxu0 %v203
    %213 = vmatpush.msra.mxu0 %v202
    %214 = vmatpush.msra.mxu0 %v201
    %215 = vmatpush.msra.mxu0 %v200
    %216 = vmatpush.msra.mxu0 %v199
    %217 = vmatpush.msra.mxu0 %v198
    %218 = vmatpush.msra.mxu0 %v197
    %219 = vmatpush.msra.mxu0 %v196
    %220 = vmatpush.msra.mxu0 %v195
    %221 = vmatpush.msra.mxu0 %v194
    %222 = vmatpush.msra.mxu0 %v193
    %223 = vmatpush.msra.mxu0 %v192
    %224 = vmatmul.f32.gmra.mxu0 %v188
    %v225 = vpop.f32.mrf.mxu0
    %v226 = vadd.f32 0.0, %v225
    %227 = vmatmul.f32.gmra.mxu0 %v189
    %v228 = vpop.f32.mrf.mxu0
    %v229 = vadd.f32 0.0, %v228
    %230 = vdwg.mxu0
    %v231 = vadd.f32 %v190, %v226
    %v232 = vadd.f32 %v191, %v229
    %233 = vst [vmem:[#allocation8] sm:$0xff] %v231
    %234 = vst [vmem:[#allocation8 + $0x8] sm:$0xff] %v232
    // Predicated region
    $region30: #{tpu_custom_call.1} parent=1 // pred_check
      _
    $region31: #{tpu_custom_call.1} parent=1 // pred_check_branch
      %236 = sbr.rel (0) target = $region33
    $region32: #{tpu_custom_call.1} parent=1 // pred_region
      %238 = vsyncadd [#allocation4], 0
      %s239 = sshll.u32 [#allocation8], 4
      %s240 = int_to_ptr.vmem [resolvable:$true] %s239
      %s241 = sshll.u32 %s3, 4
      %s242 = int_to_ptr.hbm [resolvable:$true] %s241
      %247 = dma.vmem_to_hbm [thread:$0]  %s240, 256, %s242, [#allocation4], 128, 128, 8
    $region33: #{tpu_custom_call.1} parent=1 // pred_fallthru
      _
    // Predicated region
    $region34: #{tpu_custom_call.1} parent=1 // pred_check
      _
    $region35: #{tpu_custom_call.1} parent=1 // pred_check_branch
      %249 = sbr.rel (0) target = $region37
    $region36: #{tpu_custom_call.1} parent=1 // pred_region
      %251 = dma.done [#allocation4], 256
    $region37: #{tpu_custom_call.1} parent=1 // pred_fallthru
      _
    %252 = vsyncpa [#allocation3], 1
    %253 = vsyncpa [#allocation6], 1
    %254 = vsyncpa [#allocation4], 1

</llo_original>
